<compile_context>
chip_gen: v5e
topology: v5e:2x2
jax: 0.10.0
libtpu: 0.0.40
codegen_flags: <defaults>
</compile_context>

<pallas_src>
import functools

import jax
import jax.numpy as jnp
from jax.experimental import pallas as pl
from jax.experimental.pallas import tpu as pltpu


# ---------------------------------------------------------------------------
# Fused kernel.  grid = (2 phases, nb sample-blocks), both axes "arbitrary"
# (BN stats accumulate across sample blocks, so the grid must run in order).
#   phase 0: accumulate shifted BN sums over every conv1 column (real + pooled)
#            and fold scale/shift in the epilogue of the last block.
#   phase 1: folded BN + MetaAconC + conv_w + sigmoid gate, lane-dense store.
# Block layout: x slab (C, B*W) with the batch folded into the lane axis.
# ---------------------------------------------------------------------------
def _coord_att_kernel(x_ref, xp_ref, wpk_ref, wcb_ref, o_ref,
                      ssum_ref, ssq_ref, c_ref, scale_ref, shift_ref,
                      *, width, n_total, cdt):
    f32 = jnp.float32
    phase = pl.program_id(0)
    j = pl.program_id(1)
    nb = pl.num_programs(1)

    C, bw = x_ref.shape
    b_sz = bw // width                        # samples in this block
    M = wpk_ref.shape[0]

    # Unpack the consolidated parameter slab: [w1 | Weff | b1 g b p1 p2 beff].
    wpk = wpk_ref[...]
    w1 = wpk[:, :C]                           # (M, C)  conv1 weight
    weff = wpk[:, C:C + M]                    # (M, M)  fc2 @ fc1 (MetaAconC, folded)
    off = C + M
    b1, gam, bet, p1, p2, beff = (wpk[:, off + i:off + i + 1] for i in range(6))

    def mm(a, b):                             # MXU matmul, f32 accumulation
        return jnp.dot(a.astype(cdt), b.astype(cdt), preferred_element_type=f32)

    x = x_ref[...]                            # (C, B*W)
    y = mm(w1, x) + b1                        # (M, B*W) conv1 on this block's real cols

    # ------------- phase 0: BN batch statistics (shifted single pass) -------
    @pl.when(phase == 0)
    def _stats():
        @pl.when(j == 0)
        def _init():
            c_ref[...] = jnp.mean(y, axis=1, keepdims=True)   # variance shift
            ssum_ref[...] = jnp.zeros_like(ssum_ref)
            ssq_ref[...] = jnp.zeros_like(ssq_ref)

        d = y - c_ref[...]
        ssum_ref[...] += jnp.sum(d, axis=1, keepdims=True)
        ssq_ref[...] += jnp.sum(d * d, axis=1, keepdims=True)

        @pl.when(j == nb - 1)
        def _finalize():
            # The pooled (max over W) columns also join the batch statistics.
            yp = mm(w1, xp_ref[...]) + b1                     # (M, N)
            dp = yp - c_ref[...]
            s1 = ssum_ref[...] + jnp.sum(dp, axis=1, keepdims=True)
            s2 = ssq_ref[...] + jnp.sum(dp * dp, axis=1, keepdims=True)
            inv_cnt = 1.0 / float(n_total * (width + 1))
            mu = s1 * inv_cnt
            var = jnp.maximum(s2 * inv_cnt - mu * mu, 0.0)    # biased variance
            sc = gam * jax.lax.rsqrt(var + 1e-5)
            scale_ref[...] = sc
            shift_ref[...] = bet - (c_ref[...] + mu) * sc     # mean = c + mu

    # ------------- phase 1: apply (folded BN, MetaAconC, conv_w, gate) ------
    @pl.when(phase == 1)
    def _apply():
        scale = scale_ref[...]
        shift = shift_ref[...]
        ybn = y * scale + shift                               # (M, B*W)

        # 0/1 per-sample grouping / selection matrices built from iota
        # (no data movement, no transposes, no dynamic lane slicing).
        lane = jax.lax.broadcasted_iota(jnp.int32, (b_sz, bw), 1)
        grp = jax.lax.broadcasted_iota(jnp.int32, (b_sz, bw), 0)
        e_bcast = ((lane >= grp * width) &
                   (lane < (grp + 1) * width)).astype(cdt)    # (B, B*W)
        lane_t = jax.lax.broadcasted_iota(jnp.int32, (bw, b_sz), 0)
        grp_t = jax.lax.broadcasted_iota(jnp.int32, (bw, b_sz), 1)
        e_sum = ((lane_t >= grp_t * width) &
                 (lane_t < (grp_t + 1) * width)).astype(cdt)  # (B*W, B)
        row_n = jax.lax.broadcasted_iota(jnp.int32, (n_total, b_sz), 0)
        col_b = jax.lax.broadcasted_iota(jnp.int32, (n_total, b_sz), 1)
        sel = (row_n == j * b_sz + col_b).astype(cdt)         # (N, B) this block's samples

        # MetaAconC beta = sigmoid(fc2(fc1(mean over the W+1 BN'd columns))).
        yp_bn = (mm(w1, xp_ref[...]) + b1) * scale + shift    # (M, N) pooled, BN'd
        t = (mm(ybn, e_sum) + mm(yp_bn, sel)) * (1.0 / (width + 1))   # (M, B)
        beta = jax.nn.sigmoid(mm(weff, t) + beff)             # (M, B)
        beta_l = mm(beta, e_bcast)                            # (M, B*W) per-sample bcast

        dpx = (p1 - p2) * ybn
        act = dpx * jax.nn.sigmoid(beta_l * dpx) + p2 * ybn   # MetaAconC

        wcb = wcb_ref[...]
        a = mm(wcb[:, :M], act) + wcb[:, M:M + 1]             # (C, B*W) conv_w
        o_ref[...] = (x * jax.nn.sigmoid(a)).astype(o_ref.dtype)


# ---------------------------------------------------------------------------
# Wrapper
# ---------------------------------------------------------------------------
def _pick_block_samples(n, c, w, budget_bytes):
    """Largest divisor B of n s.t. the (C, B*W) x-block + out-block, double
    buffered, fit the budget and B*W is 128-lane aligned (or B == n, which is
    exempt from the (8,128) BlockSpec rule)."""
    best, found = n, False
    for b in range(1, n + 1):
        if n % b:
            continue
        if 4 * c * b * w * 4 > budget_bytes:      # 2 bufs x (x-block + out-block)
            continue
        if b == n or (b * w) % 128 == 0:
            best, found = b, True
    if not found:
        # TODO(synk): pad the sample axis when no divisor of N yields a
        # 128-aligned lane block and the whole batch exceeds the VMEM budget.
        best = n
    return best


def coord_att(x, p, *, compute_dtype=jnp.float32, block_budget_bytes=8 << 20):
    """x: (N, C, W) float32 (PyTorch NCW layout).  Returns (N, C, W)."""
    f32 = jnp.float32
    x = x.astype(f32)
    N, C, W = x.shape
    M = p["w1"].shape[0]
    assert p["wcw"].shape[0] == C, "identity * a_w requires oup == inp"

    # Fold MetaAconC fc2(fc1(.)) exactly (no intermediate nonlinearity).
    weff = jnp.dot(p["f2w"], p["f1w"], precision="highest")          # (M, M)
    beff = jnp.dot(p["f2w"], p["f1b"], precision="highest") + p["f2b"]  # (M, 1)

    # Consolidated parameter slabs (one resident DMA each).
    wpk = jnp.concatenate(
        [p["w1"], weff, p["b1"], p["gamma1"], p["beta1"], p["p1"], p["p2"], beff],
        axis=1)                                                      # (M, C+M+6)
    wcb = jnp.concatenate([p["wcw"], p["bcw"]], axis=1)              # (C, M+1)

    # Lane-dense layout: fold the batch into the lane axis (layout plumbing).
    x2 = jnp.transpose(x, (1, 0, 2)).reshape(C, N * W)               # (C, N*W)
    xp = jnp.max(x, axis=2).T                                        # (C, N) AdaptiveMaxPool1d(1)

    B = _pick_block_samples(N, C, W, block_budget_bytes)
    nb = N // B
    BW = B * W

    resident = 4 * (xp.size + wpk.size + wcb.size)
    need = 4 * C * BW * 4 + 2 * resident + (2 << 20)
    vmem_limit = int(min(64 << 20, max(32 << 20, need)))             # safe on v7x's 64 MiB

    kernel = functools.partial(_coord_att_kernel, width=W, n_total=N,
                               cdt=compute_dtype)

    out2 = pl.pallas_call(
        kernel,
        grid=(2, nb),                                # (phase, sample-block), phase-major
        in_specs=[
            pl.BlockSpec((C, BW), lambda k, j: (0, j)),          # x slab (lane-dense)
            pl.BlockSpec((C, N), lambda k, j: (0, 0)),           # pooled cols (resident)
            pl.BlockSpec((M, C + M + 6), lambda k, j: (0, 0)),   # packed M-row params
            pl.BlockSpec((C, M + 1), lambda k, j: (0, 0)),       # conv_w weight|bias
        ],
        # Phase 0 never writes the output; map every phase-0 step onto block 0
        # so no uninitialised block is ever written back to HBM.
        out_specs=pl.BlockSpec((C, BW), lambda k, j: (0, j * k)),
        out_shape=jax.ShapeDtypeStruct((C, N * W), f32),
        scratch_shapes=[
            pltpu.VMEM((M, 1), f32),   # running sum  (shifted)
            pltpu.VMEM((M, 1), f32),   # running sumsq (shifted)
            pltpu.VMEM((M, 1), f32),   # variance shift c
            pltpu.VMEM((M, 1), f32),   # folded BN scale
            pltpu.VMEM((M, 1), f32),   # folded BN shift
        ],
        compiler_params=pltpu.CompilerParams(
            # BN stats accumulate across sample blocks -> sequential grid.
            # TODO(synk): on v7x (2 TCs) a two-pass variant with a "parallel"
            # sample axis would use both cores; at these sizes fusion dominates.
            dimension_semantics=("arbitrary", "arbitrary"),
            vmem_limit_bytes=vmem_limit,
        ),
    )(x2, xp, wpk, wcb)

    return out2.reshape(C, N, W).transpose(1, 0, 2)


# ---------------------------------------------------------------------------
# Pure-JAX reference (mirrors the PyTorch forward exactly) and params
# ---------------------------------------------------------------------------
def coord_att_ref(x, p):
    hp = "highest"
    N, C, W = x.shape
    xp = jnp.max(x, axis=2, keepdims=True)                           # AdaptiveMaxPool1d(1)
    y = jnp.concatenate([x, xp], axis=2)                             # (N, C, W+1)
    y = jnp.einsum("mc,ncw->nmw", p["w1"], y, precision=hp) + p["b1"][None]
    mean = jnp.mean(y, axis=(0, 2), keepdims=True)
    var = jnp.mean((y - mean) ** 2, axis=(0, 2), keepdims=True)
    y = (y - mean) / jnp.sqrt(var + 1e-5) * p["gamma1"][None] + p["beta1"][None]
    t = jnp.mean(y, axis=2, keepdims=True)                           # MetaAconC
    h = jnp.einsum("hm,nmo->nho", p["f1w"], t, precision=hp) + p["f1b"][None]
    beta = jax.nn.sigmoid(
        jnp.einsum("mh,nho->nmo", p["f2w"], h, precision=hp) + p["f2b"][None])
    dpx = (p["p1"] - p["p2"])[None] * y
    y = dpx * jax.nn.sigmoid(beta * dpx) + p["p2"][None] * y
    a = jnp.einsum("om,nmw->now", p["wcw"], y[:, :, :W], precision=hp) + p["bcw"][None]
    return x * jax.nn.sigmoid(a)


def init_params(key, inp, oup, reduction=32):
    """Deterministic synthetic parameters matching the module's shapes."""
    mip = max(6, inp // reduction)
    r = 16
    hid = max(r, mip // r)
    ks = jax.random.split(key, 10)

    def u(k, shape, fan_in):
        bound = 1.0 / (fan_in ** 0.5)
        return jax.random.uniform(k, shape, jnp.float32, -bound, bound)

    return dict(
        w1=u(ks[0], (mip, inp), inp),                  # conv1.weight[:, :, 0]
        b1=u(ks[1], (mip, 1), inp),                    # conv1.bias
        gamma1=jnp.ones((mip, 1), jnp.float32),        # bn1.weight
        beta1=jnp.zeros((mip, 1), jnp.float32),        # bn1.bias
        p1=jax.random.normal(ks[2], (mip, 1), jnp.float32),   # MetaAconC.p1
        p2=jax.random.normal(ks[3], (mip, 1), jnp.float32),   # MetaAconC.p2
        f1w=u(ks[4], (hid, mip), mip),                 # MetaAconC.fc1.weight
        f1b=u(ks[5], (hid, 1), mip),
        f2w=u(ks[6], (mip, hid), hid),                 # MetaAconC.fc2.weight
        f2b=u(ks[7], (mip, 1), hid),
        wcw=u(ks[8], (oup, mip), mip),                 # conv_w.weight[:, :, 0]
        bcw=u(ks[9], (oup, 1), mip),                   # conv_w.bias
    )


if __name__ == "__main__":
    key = jax.random.PRNGKey(0)
    kx, kp = jax.random.split(key)

    # inp == oup == C is required by `identity * a_w`.
    N, C, W = 8, 32, 16                     # N*W = 128 lanes -> one lane-dense block
    x = jax.random.normal(kx, (N, C, W), jnp.float32)
    params = init_params(kp, inp=C, oup=C, reduction=32)

    out = jax.jit(coord_att)(x, params)
    jax.block_until_ready(out)
    assert out.shape == (N, C, W) and out.dtype == jnp.float32
    ref = coord_att_ref(x, params)
    err = float(jnp.max(jnp.abs(out - ref)))
    assert err < 1e-3, f"mismatch vs reference: max abs err = {err}"

    # Multi-block path (nb > 1): shrink the VMEM block budget to force B=8.
    N2 = 16
    x_big = jax.random.normal(kx, (N2, C, W), jnp.float32)
    out2 = jax.jit(
        lambda a, b: coord_att(a, b, block_budget_bytes=100_000))(x_big, params)
    jax.block_until_ready(out2)
    ref2 = coord_att_ref(x_big, params)
    err2 = float(jnp.max(jnp.abs(out2 - ref2)))
    assert err2 < 1e-3, f"multi-block mismatch: max abs err = {err2}"

    # Optional bf16-MXU path (perf option) -- loose tolerance smoke test.
    out3 = jax.jit(
        lambda a, b: coord_att(a, b, compute_dtype=jnp.bfloat16))(x, params)
    jax.block_until_ready(out3)
    err3 = float(jnp.max(jnp.abs(out3 - ref)))
    assert err3 < 5e-2, f"bf16 path mismatch: max abs err = {err3}"

    print("KERNEL_OK")
</pallas_src>

<mosaic_0001>
module attributes {stable_mosaic.version = 11 : i64} {
  func.func @_coord_att_kernel(%arg0: i32, %arg1: i32, %arg2: memref<32x128xf32, #tpu.memory_space<vmem>>, %arg3: memref<32x8xf32, #tpu.memory_space<vmem>>, %arg4: memref<6x44xf32, #tpu.memory_space<vmem>>, %arg5: memref<32x7xf32, #tpu.memory_space<vmem>>, %arg6: memref<32x128xf32, #tpu.memory_space<vmem>>, %arg7: memref<6x1xf32, #tpu.memory_space<vmem>>, %arg8: memref<6x1xf32, #tpu.memory_space<vmem>>, %arg9: memref<6x1xf32, #tpu.memory_space<vmem>>, %arg10: memref<6x1xf32, #tpu.memory_space<vmem>>, %arg11: memref<6x1xf32, #tpu.memory_space<vmem>>) attributes {dimension_semantics = [#tpu.dimension_semantics<arbitrary>, #tpu.dimension_semantics<arbitrary>], iteration_bounds = array<i64: 2, 1>, scalar_prefetch = 0 : i64, scratch_operands = 5 : i64, tpu.core_type = #tpu.core_type<tc>, window_params = [{transform_indices = @transform_0, window_bounds = array<i64: 32, 128>}, {pipeline_mode = #tpu.pipeline_mode<synchronous>, transform_indices = @transform_1, window_bounds = array<i64: 32, 8>}, {pipeline_mode = #tpu.pipeline_mode<synchronous>, transform_indices = @transform_2, window_bounds = array<i64: 6, 44>}, {pipeline_mode = #tpu.pipeline_mode<synchronous>, transform_indices = @transform_3, window_bounds = array<i64: 32, 7>}, {transform_indices = @transform_4, window_bounds = array<i64: 32, 128>}]} {
    %c0 = arith.constant 0 : index
    %c0_0 = arith.constant 0 : index
    %0 = vector.load %arg4[%c0, %c0_0] : memref<6x44xf32, #tpu.memory_space<vmem>>, vector<6x44xf32>
    %1 = vector.extract_strided_slice %0 {offsets = [0, 0], sizes = [6, 32], strides = [1, 1]} : vector<6x44xf32> to vector<6x32xf32>
    %2 = vector.extract_strided_slice %0 {offsets = [0, 32], sizes = [6, 6], strides = [1, 1]} : vector<6x44xf32> to vector<6x6xf32>
    %3 = vector.extract_strided_slice %0 {offsets = [0, 38], sizes = [6, 1], strides = [1, 1]} : vector<6x44xf32> to vector<6x1xf32>
    %4 = vector.extract_strided_slice %0 {offsets = [0, 39], sizes = [6, 1], strides = [1, 1]} : vector<6x44xf32> to vector<6x1xf32>
    %5 = vector.extract_strided_slice %0 {offsets = [0, 40], sizes = [6, 1], strides = [1, 1]} : vector<6x44xf32> to vector<6x1xf32>
    %6 = vector.extract_strided_slice %0 {offsets = [0, 41], sizes = [6, 1], strides = [1, 1]} : vector<6x44xf32> to vector<6x1xf32>
    %7 = vector.extract_strided_slice %0 {offsets = [0, 42], sizes = [6, 1], strides = [1, 1]} : vector<6x44xf32> to vector<6x1xf32>
    %8 = vector.extract_strided_slice %0 {offsets = [0, 43], sizes = [6, 1], strides = [1, 1]} : vector<6x44xf32> to vector<6x1xf32>
    %c0_1 = arith.constant 0 : index
    %c0_2 = arith.constant 0 : index
    %9 = vector.load %arg2[%c0_1, %c0_2] : memref<32x128xf32, #tpu.memory_space<vmem>>, vector<32x128xf32>
    %cst = arith.constant dense<0.000000e+00> : vector<6x128xf32>
    %10 = tpu.matmul %1, %9, %cst {dimension_numbers = #tpu.dot_dimension_numbers<[1], [0], [0], [1], [0, 0, 1, 1], [], []>} : vector<6x32xf32>, vector<32x128xf32>, vector<6x128xf32> -> vector<6x128xf32>
    %11 = vector.broadcast %3 : vector<6x1xf32> to vector<6x128xf32>
    %12 = arith.addf %10, %11 : vector<6x128xf32>
    %c0_i32 = arith.constant 0 : i32
    %13 = arith.cmpi eq, %arg0, %c0_i32 : i32
    %14 = arith.extui %13 : i1 to i32
    %c0_i32_3 = arith.constant 0 : i32
    %15 = arith.cmpi ne, %14, %c0_i32_3 : i32
    scf.if %15 {
      %c0_i32_5 = arith.constant 0 : i32
      %19 = arith.cmpi eq, %arg1, %c0_i32_5 : i32
      %20 = arith.extui %19 : i1 to i32
      %c0_i32_6 = arith.constant 0 : i32
      %21 = arith.cmpi ne, %20, %c0_i32_6 : i32
      scf.if %21 {
        %cst_21 = arith.constant dense<0.000000e+00> : vector<6xf32>
        %39 = vector.multi_reduction <add>, %12, %cst_21 [1] : vector<6x128xf32> to vector<6xf32>
        %40 = vector.shape_cast %39 : vector<6xf32> to vector<6x1xf32>
        %cst_22 = arith.constant 1.280000e+02 : f32
        %41 = vector.broadcast %cst_22 : f32 to vector<6x1xf32>
        %42 = arith.divf %40, %41 : vector<6x1xf32>
        %c0_23 = arith.constant 0 : index
        %c0_24 = arith.constant 0 : index
        %43 = vector.load %arg9[%c0_23, %c0_24] : memref<6x1xf32, #tpu.memory_space<vmem>>, vector<6x1xf32>
        tpu.vector_store %arg9[%c0_23, %c0_24], %42 {strides = array<i32>} : memref<6x1xf32, #tpu.memory_space<vmem>>, vector<6x1xf32>,
        %cst_25 = arith.constant 0.000000e+00 : f32
        %44 = vector.broadcast %cst_25 : f32 to vector<6x1xf32>
        %c0_26 = arith.constant 0 : index
        %c0_27 = arith.constant 0 : index
        %45 = vector.load %arg7[%c0_26, %c0_27] : memref<6x1xf32, #tpu.memory_space<vmem>>, vector<6x1xf32>
        tpu.vector_store %arg7[%c0_26, %c0_27], %44 {strides = array<i32>} : memref<6x1xf32, #tpu.memory_space<vmem>>, vector<6x1xf32>,
        %cst_28 = arith.constant 0.000000e+00 : f32
        %46 = vector.broadcast %cst_28 : f32 to vector<6x1xf32>
        %c0_29 = arith.constant 0 : index
        %c0_30 = arith.constant 0 : index
        %47 = vector.load %arg8[%c0_29, %c0_30] : memref<6x1xf32, #tpu.memory_space<vmem>>, vector<6x1xf32>
        tpu.vector_store %arg8[%c0_29, %c0_30], %46 {strides = array<i32>} : memref<6x1xf32, #tpu.memory_space<vmem>>, vector<6x1xf32>,
      } else {
      }
      %c0_7 = arith.constant 0 : index
      %c0_8 = arith.constant 0 : index
      %22 = vector.load %arg9[%c0_7, %c0_8] : memref<6x1xf32, #tpu.memory_space<vmem>>, vector<6x1xf32>
      %23 = vector.broadcast %22 : vector<6x1xf32> to vector<6x128xf32>
      %24 = arith.subf %12, %23 : vector<6x128xf32>
      %c0_9 = arith.constant 0 : index
      %c0_10 = arith.constant 0 : index
      %25 = vector.load %arg7[%c0_9, %c0_10] : memref<6x1xf32, #tpu.memory_space<vmem>>, vector<6x1xf32>
      %cst_11 = arith.constant dense<0.000000e+00> : vector<6xf32>
      %26 = vector.multi_reduction <add>, %24, %cst_11 [1] : vector<6x128xf32> to vector<6xf32>
      %27 = vector.shape_cast %26 : vector<6xf32> to vector<6x1xf32>
      %28 = arith.addf %25, %27 : vector<6x1xf32>
      %c0_12 = arith.constant 0 : index
      %c0_13 = arith.constant 0 : index
      %29 = vector.load %arg7[%c0_12, %c0_13] : memref<6x1xf32, #tpu.memory_space<vmem>>, vector<6x1xf32>
      tpu.vector_store %arg7[%c0_12, %c0_13], %28 {strides = array<i32>} : memref<6x1xf32, #tpu.memory_space<vmem>>, vector<6x1xf32>,
      %c0_14 = arith.constant 0 : index
      %c0_15 = arith.constant 0 : index
      %30 = vector.load %arg8[%c0_14, %c0_15] : memref<6x1xf32, #tpu.memory_space<vmem>>, vector<6x1xf32>
      %31 = arith.mulf %24, %24 : vector<6x128xf32>
      %cst_16 = arith.constant dense<0.000000e+00> : vector<6xf32>
      %32 = vector.multi_reduction <add>, %31, %cst_16 [1] : vector<6x128xf32> to vector<6xf32>
      %33 = vector.shape_cast %32 : vector<6xf32> to vector<6x1xf32>
      %34 = arith.addf %30, %33 : vector<6x1xf32>
      %c0_17 = arith.constant 0 : index
      %c0_18 = arith.constant 0 : index
      %35 = vector.load %arg8[%c0_17, %c0_18] : memref<6x1xf32, #tpu.memory_space<vmem>>, vector<6x1xf32>
      tpu.vector_store %arg8[%c0_17, %c0_18], %34 {strides = array<i32>} : memref<6x1xf32, #tpu.memory_space<vmem>>, vector<6x1xf32>,
      %c0_i32_19 = arith.constant 0 : i32
      %36 = arith.cmpi eq, %arg1, %c0_i32_19 : i32
      %37 = arith.extui %36 : i1 to i32
      %c0_i32_20 = arith.constant 0 : i32
      %38 = arith.cmpi ne, %37, %c0_i32_20 : i32
      scf.if %38 {
        %c0_21 = arith.constant 0 : index
        %c0_22 = arith.constant 0 : index
        %39 = vector.load %arg3[%c0_21, %c0_22] : memref<32x8xf32, #tpu.memory_space<vmem>>, vector<32x8xf32>
        %cst_23 = arith.constant dense<0.000000e+00> : vector<6x8xf32>
        %40 = tpu.matmul %1, %39, %cst_23 {dimension_numbers = #tpu.dot_dimension_numbers<[1], [0], [0], [1], [0, 0, 1, 1], [], []>} : vector<6x32xf32>, vector<32x8xf32>, vector<6x8xf32> -> vector<6x8xf32>
        %41 = vector.broadcast %3 : vector<6x1xf32> to vector<6x8xf32>
        %42 = arith.addf %40, %41 : vector<6x8xf32>
        %c0_24 = arith.constant 0 : index
        %c0_25 = arith.constant 0 : index
        %43 = vector.load %arg9[%c0_24, %c0_25] : memref<6x1xf32, #tpu.memory_space<vmem>>, vector<6x1xf32>
        %44 = vector.broadcast %43 : vector<6x1xf32> to vector<6x8xf32>
        %45 = arith.subf %42, %44 : vector<6x8xf32>
        %c0_26 = arith.constant 0 : index
        %c0_27 = arith.constant 0 : index
        %46 = vector.load %arg7[%c0_26, %c0_27] : memref<6x1xf32, #tpu.memory_space<vmem>>, vector<6x1xf32>
        %cst_28 = arith.constant dense<0.000000e+00> : vector<6xf32>
        %47 = vector.multi_reduction <add>, %45, %cst_28 [1] : vector<6x8xf32> to vector<6xf32>
        %48 = vector.shape_cast %47 : vector<6xf32> to vector<6x1xf32>
        %49 = arith.addf %46, %48 : vector<6x1xf32>
        %c0_29 = arith.constant 0 : index
        %c0_30 = arith.constant 0 : index
        %50 = vector.load %arg8[%c0_29, %c0_30] : memref<6x1xf32, #tpu.memory_space<vmem>>, vector<6x1xf32>
        %51 = arith.mulf %45, %45 : vector<6x8xf32>
        %cst_31 = arith.constant dense<0.000000e+00> : vector<6xf32>
        %52 = vector.multi_reduction <add>, %51, %cst_31 [1] : vector<6x8xf32> to vector<6xf32>
        %53 = vector.shape_cast %52 : vector<6xf32> to vector<6x1xf32>
        %54 = arith.addf %50, %53 : vector<6x1xf32>
        %cst_32 = arith.constant 0.0073529412 : f32
        %55 = vector.broadcast %cst_32 : f32 to vector<6x1xf32>
        %56 = arith.mulf %49, %55 : vector<6x1xf32>
        %cst_33 = arith.constant 0.0073529412 : f32
        %57 = vector.broadcast %cst_33 : f32 to vector<6x1xf32>
        %58 = arith.mulf %54, %57 : vector<6x1xf32>
        %59 = arith.mulf %56, %56 : vector<6x1xf32>
        %60 = arith.subf %58, %59 : vector<6x1xf32>
        %cst_34 = arith.constant 0.000000e+00 : f32
        %61 = vector.broadcast %cst_34 : f32 to vector<6x1xf32>
        %62 = arith.maximumf %60, %61 : vector<6x1xf32>
        %cst_35 = arith.constant 9.99999974E-6 : f32
        %63 = vector.broadcast %cst_35 : f32 to vector<6x1xf32>
        %64 = arith.addf %62, %63 : vector<6x1xf32>
        %65 = math.rsqrt %64 : vector<6x1xf32>
        %66 = arith.mulf %4, %65 : vector<6x1xf32>
        %c0_36 = arith.constant 0 : index
        %c0_37 = arith.constant 0 : index
        %67 = vector.load %arg10[%c0_36, %c0_37] : memref<6x1xf32, #tpu.memory_space<vmem>>, vector<6x1xf32>
        tpu.vector_store %arg10[%c0_36, %c0_37], %66 {strides = array<i32>} : memref<6x1xf32, #tpu.memory_space<vmem>>, vector<6x1xf32>,
        %c0_38 = arith.constant 0 : index
        %c0_39 = arith.constant 0 : index
        %68 = vector.load %arg9[%c0_38, %c0_39] : memref<6x1xf32, #tpu.memory_space<vmem>>, vector<6x1xf32>
        %69 = arith.addf %68, %56 : vector<6x1xf32>
        %70 = arith.mulf %69, %66 : vector<6x1xf32>
        %71 = arith.subf %5, %70 : vector<6x1xf32>
        %c0_40 = arith.constant 0 : index
        %c0_41 = arith.constant 0 : index
        %72 = vector.load %arg11[%c0_40, %c0_41] : memref<6x1xf32, #tpu.memory_space<vmem>>, vector<6x1xf32>
        tpu.vector_store %arg11[%c0_40, %c0_41], %71 {strides = array<i32>} : memref<6x1xf32, #tpu.memory_space<vmem>>, vector<6x1xf32>,
      } else {
      }
    } else {
    }
    %c1_i32 = arith.constant 1 : i32
    %16 = arith.cmpi eq, %arg0, %c1_i32 : i32
    %17 = arith.extui %16 : i1 to i32
    %c0_i32_4 = arith.constant 0 : i32
    %18 = arith.cmpi ne, %17, %c0_i32_4 : i32
    scf.if %18 {
      %c0_5 = arith.constant 0 : index
      %c0_6 = arith.constant 0 : index
      %19 = vector.load %arg10[%c0_5, %c0_6] : memref<6x1xf32, #tpu.memory_space<vmem>>, vector<6x1xf32>
      %c0_7 = arith.constant 0 : index
      %c0_8 = arith.constant 0 : index
      %20 = vector.load %arg11[%c0_7, %c0_8] : memref<6x1xf32, #tpu.memory_space<vmem>>, vector<6x1xf32>
      %21 = vector.broadcast %19 : vector<6x1xf32> to vector<6x128xf32>
      %22 = arith.mulf %12, %21 : vector<6x128xf32>
      %23 = vector.broadcast %20 : vector<6x1xf32> to vector<6x128xf32>
      %24 = arith.addf %22, %23 : vector<6x128xf32>
      %25 = tpu.iota {dimensions = array<i32: 1>} : vector<8x128xi32>
      %26 = tpu.iota {dimensions = array<i32: 0>} : vector<8x128xi32>
      %c16_i32 = arith.constant 16 : i32
      %27 = vector.broadcast %c16_i32 : i32 to vector<8x128xi32>
      %28 = arith.muli %26, %27 : vector<8x128xi32>
      %29 = arith.cmpi sge, %25, %28 : vector<8x128xi32>
      %c1_i32_9 = arith.constant 1 : i32
      %30 = vector.broadcast %c1_i32_9 : i32 to vector<8x128xi32>
      %31 = arith.addi %26, %30 : vector<8x128xi32>
      %c16_i32_10 = arith.constant 16 : i32
      %32 = vector.broadcast %c16_i32_10 : i32 to vector<8x128xi32>
      %33 = arith.muli %31, %32 : vector<8x128xi32>
      %34 = arith.cmpi slt, %25, %33 : vector<8x128xi32>
      %35 = arith.andi %29, %34 : vector<8x128xi1>
      %36 = arith.extui %35 : vector<8x128xi1> to vector<8x128xi32>
      %37 = arith.sitofp %36 : vector<8x128xi32> to vector<8x128xf32>
      %38 = tpu.iota {dimensions = array<i32: 0>} : vector<128x8xi32>
      %39 = tpu.iota {dimensions = array<i32: 1>} : vector<128x8xi32>
      %c16_i32_11 = arith.constant 16 : i32
      %40 = vector.broadcast %c16_i32_11 : i32 to vector<128x8xi32>
      %41 = arith.muli %39, %40 : vector<128x8xi32>
      %42 = arith.cmpi sge, %38, %41 : vector<128x8xi32>
      %c1_i32_12 = arith.constant 1 : i32
      %43 = vector.broadcast %c1_i32_12 : i32 to vector<128x8xi32>
      %44 = arith.addi %39, %43 : vector<128x8xi32>
      %c16_i32_13 = arith.constant 16 : i32
      %45 = vector.broadcast %c16_i32_13 : i32 to vector<128x8xi32>
      %46 = arith.muli %44, %45 : vector<128x8xi32>
      %47 = arith.cmpi slt, %38, %46 : vector<128x8xi32>
      %48 = arith.andi %42, %47 : vector<128x8xi1>
      %49 = arith.extui %48 : vector<128x8xi1> to vector<128x8xi32>
      %50 = arith.sitofp %49 : vector<128x8xi32> to vector<128x8xf32>
      %51 = tpu.iota {dimensions = array<i32: 0>} : vector<8x8xi32>
      %52 = tpu.iota {dimensions = array<i32: 1>} : vector<8x8xi32>
      %c8_i32 = arith.constant 8 : i32
      %53 = arith.muli %arg1, %c8_i32 : i32
      %54 = vector.broadcast %53 : i32 to vector<8x8xi32>
      %55 = arith.addi %54, %52 : vector<8x8xi32>
      %56 = arith.cmpi eq, %51, %55 : vector<8x8xi32>
      %57 = arith.extui %56 : vector<8x8xi1> to vector<8x8xi32>
      %58 = arith.sitofp %57 : vector<8x8xi32> to vector<8x8xf32>
      %c0_14 = arith.constant 0 : index
      %c0_15 = arith.constant 0 : index
      %59 = vector.load %arg3[%c0_14, %c0_15] : memref<32x8xf32, #tpu.memory_space<vmem>>, vector<32x8xf32>
      %cst_16 = arith.constant dense<0.000000e+00> : vector<6x8xf32>
      %60 = tpu.matmul %1, %59, %cst_16 {dimension_numbers = #tpu.dot_dimension_numbers<[1], [0], [0], [1], [0, 0, 1, 1], [], []>} : vector<6x32xf32>, vector<32x8xf32>, vector<6x8xf32> -> vector<6x8xf32>
      %61 = vector.broadcast %3 : vector<6x1xf32> to vector<6x8xf32>
      %62 = arith.addf %60, %61 : vector<6x8xf32>
      %63 = vector.broadcast %19 : vector<6x1xf32> to vector<6x8xf32>
      %64 = arith.mulf %62, %63 : vector<6x8xf32>
      %65 = vector.broadcast %20 : vector<6x1xf32> to vector<6x8xf32>
      %66 = arith.addf %64, %65 : vector<6x8xf32>
      %cst_17 = arith.constant dense<0.000000e+00> : vector<6x8xf32>
      %67 = tpu.matmul %24, %50, %cst_17 {dimension_numbers = #tpu.dot_dimension_numbers<[1], [0], [0], [1], [0, 0, 1, 1], [], []>} : vector<6x128xf32>, vector<128x8xf32>, vector<6x8xf32> -> vector<6x8xf32>
      %cst_18 = arith.constant dense<0.000000e+00> : vector<6x8xf32>
      %68 = tpu.matmul %66, %58, %cst_18 {dimension_numbers = #tpu.dot_dimension_numbers<[1], [0], [0], [1], [0, 0, 1, 1], [], []>} : vector<6x8xf32>, vector<8x8xf32>, vector<6x8xf32> -> vector<6x8xf32>
      %69 = arith.addf %67, %68 : vector<6x8xf32>
      %cst_19 = arith.constant 0.0588235296 : f32
      %70 = vector.broadcast %cst_19 : f32 to vector<6x8xf32>
      %71 = arith.mulf %69, %70 : vector<6x8xf32>
      %cst_20 = arith.constant dense<0.000000e+00> : vector<6x8xf32>
      %72 = tpu.matmul %2, %71, %cst_20 {dimension_numbers = #tpu.dot_dimension_numbers<[1], [0], [0], [1], [0, 0, 1, 1], [], []>} : vector<6x6xf32>, vector<6x8xf32>, vector<6x8xf32> -> vector<6x8xf32>
      %73 = vector.broadcast %8 : vector<6x1xf32> to vector<6x8xf32>
      %74 = arith.addf %72, %73 : vector<6x8xf32>
      %75 = arith.negf %74 : vector<6x8xf32>
      %76 = math.exp %75 : vector<6x8xf32>
      %cst_21 = arith.constant 1.000000e+00 : f32
      %77 = vector.broadcast %cst_21 : f32 to vector<6x8xf32>
      %78 = arith.addf %77, %76 : vector<6x8xf32>
      %79 = arith.divf %77, %78 : vector<6x8xf32>
      %cst_22 = arith.constant dense<0.000000e+00> : vector<6x128xf32>
      %80 = tpu.matmul %79, %37, %cst_22 {dimension_numbers = #tpu.dot_dimension_numbers<[1], [0], [0], [1], [0, 0, 1, 1], [], []>} : vector<6x8xf32>, vector<8x128xf32>, vector<6x128xf32> -> vector<6x128xf32>
      %81 = arith.subf %6, %7 : vector<6x1xf32>
      %82 = vector.broadcast %81 : vector<6x1xf32> to vector<6x128xf32>
      %83 = arith.mulf %82, %24 : vector<6x128xf32>
      %84 = arith.mulf %80, %83 : vector<6x128xf32>
      %85 = arith.negf %84 : vector<6x128xf32>
      %86 = math.exp %85 : vector<6x128xf32>
      %cst_23 = arith.constant 1.000000e+00 : f32
      %87 = vector.broadcast %cst_23 : f32 to vector<6x128xf32>
      %88 = arith.addf %87, %86 : vector<6x128xf32>
      %89 = arith.divf %87, %88 : vector<6x128xf32>
      %90 = arith.mulf %83, %89 : vector<6x128xf32>
      %91 = vector.broadcast %7 : vector<6x1xf32> to vector<6x128xf32>
      %92 = arith.mulf %91, %24 : vector<6x128xf32>
      %93 = arith.addf %90, %92 : vector<6x128xf32>
      %c0_24 = arith.constant 0 : index
      %c0_25 = arith.constant 0 : index
      %94 = vector.load %arg5[%c0_24, %c0_25] : memref<32x7xf32, #tpu.memory_space<vmem>>, vector<32x7xf32>
      %95 = vector.extract_strided_slice %94 {offsets = [0, 0], sizes = [32, 6], strides = [1, 1]} : vector<32x7xf32> to vector<32x6xf32>
      %cst_26 = arith.constant dense<0.000000e+00> : vector<32x128xf32>
      %96 = tpu.matmul %95, %93, %cst_26 {dimension_numbers = #tpu.dot_dimension_numbers<[1], [0], [0], [1], [0, 0, 1, 1], [], []>} : vector<32x6xf32>, vector<6x128xf32>, vector<32x128xf32> -> vector<32x128xf32>
      %97 = vector.extract_strided_slice %94 {offsets = [0, 6], sizes = [32, 1], strides = [1, 1]} : vector<32x7xf32> to vector<32x1xf32>
      %98 = vector.broadcast %97 : vector<32x1xf32> to vector<32x128xf32>
      %99 = arith.addf %96, %98 : vector<32x128xf32>
      %100 = arith.negf %99 : vector<32x128xf32>
      %101 = math.exp %100 : vector<32x128xf32>
      %cst_27 = arith.constant 1.000000e+00 : f32
      %102 = vector.broadcast %cst_27 : f32 to vector<32x128xf32>
      %103 = arith.addf %102, %101 : vector<32x128xf32>
      %104 = arith.divf %102, %103 : vector<32x128xf32>
      %105 = arith.mulf %9, %104 : vector<32x128xf32>
      %c0_28 = arith.constant 0 : index
      %c0_29 = arith.constant 0 : index
      %106 = vector.load %arg6[%c0_28, %c0_29] : memref<32x128xf32, #tpu.memory_space<vmem>>, vector<32x128xf32>
      tpu.vector_store %arg6[%c0_28, %c0_29], %105 {strides = array<i32>} : memref<32x128xf32, #tpu.memory_space<vmem>>, vector<32x128xf32>,
    } else {
    }
    return
  }
  func.func @transform_0(%arg0: i32, %arg1: i32) -> (i32, i32) {
    %c0_i32 = arith.constant 0 : i32
    %c0_i32_0 = arith.constant 0 : i32
    return %c0_i32, %arg1 : i32, i32
  }
  func.func @transform_1(%arg0: i32, %arg1: i32) -> (i32, i32) {
    %c0_i32 = arith.constant 0 : i32
    %c0_i32_0 = arith.constant 0 : i32
    %c0_i32_1 = arith.constant 0 : i32
    return %c0_i32, %c0_i32_0 : i32, i32
  }
  func.func @transform_2(%arg0: i32, %arg1: i32) -> (i32, i32) {
    %c0_i32 = arith.constant 0 : i32
    %c0_i32_0 = arith.constant 0 : i32
    %c0_i32_1 = arith.constant 0 : i32
    return %c0_i32, %c0_i32_0 : i32, i32
  }
  func.func @transform_3(%arg0: i32, %arg1: i32) -> (i32, i32) {
    %c0_i32 = arith.constant 0 : i32
    %c0_i32_0 = arith.constant 0 : i32
    %c0_i32_1 = arith.constant 0 : i32
    return %c0_i32, %c0_i32_0 : i32, i32
  }
  func.func @transform_4(%arg0: i32, %arg1: i32) -> (i32, i32) {
    %0 = arith.muli %arg1, %arg0 : i32
    %c0_i32 = arith.constant 0 : i32
    %c0_i32_0 = arith.constant 0 : i32
    return %c0_i32, %0 : i32, i32
  }
}

</mosaic_0001>

<llo_original>
// kernel: coord_att.1
$region0: #{coord_att.1}
  #allocation0 [shape = 'u32[]', space=smem, size = 0x4, offset = 0x4, fixed_abs, tag = 'smem constant byte address 0x4 - core index']
  #allocation1 [shape = 'u32[72,128]{1,0:T(1,128)}', space=vmem, size = 0x9000, scoped, tag = 'internal scratch']
  #allocation2 [shape = 'f32[6,1]{1,0:T(8,128)}', space=vmem, size = 0x1000, scoped, tag = 'scratch operand']
  #allocation3 [shape = 'f32[6,1]{1,0:T(8,128)}', space=vmem, size = 0x1000, scoped, tag = 'scratch operand']
  #allocation4 [shape = 'f32[6,1]{1,0:T(8,128)}', space=vmem, size = 0x1000, scoped, tag = 'scratch operand']
  #allocation5 [shape = 'f32[6,1]{1,0:T(8,128)}', space=vmem, size = 0x1000, scoped, tag = 'scratch operand']
  #allocation6 [shape = 'f32[6,1]{1,0:T(8,128)}', space=vmem, size = 0x1000, scoped, tag = 'scratch operand']
  %s0 = inlined_call_operand.vmem [shape: f32[32,128], index: 0, kind: input, shape index: {}]
  %s1 = inlined_call_operand.vmem [shape: f32[32,8], index: 1, kind: input, shape index: {}]
  %s2 = inlined_call_operand.vmem [shape: f32[6,44], index: 2, kind: input, shape index: {}]
  %s3 = inlined_call_operand.vmem [shape: f32[32,7], index: 3, kind: input, shape index: {}]
  %s4 = inlined_call_operand.vmem [shape: f32[32,128], index: 4, kind: output, shape index: {}]
  %s5 = sld [smem:[#allocation0]]
  $region65: #{coord_att.1} parent=0
    _
  %s7 = ssub.s32 1, %s5
  %s8 = scalar_select 0, %s7, %s5
  loop: start=0, step=1, limit=4
  $region2: #{coord_att.1} parent=0 // loop_pre_header
    _
  $region3: #{coord_att.1} parent=0 // loop_header
    %s10 = sphi 0, %s14
    %p11 = scmp.ge.s32.totalorder %s10, 4
    %s17 = sphi 0, %s29
    %s18 = sphi 0, %s25
    %s19 = sphi 0, %s17
    %s20 = sphi 0, %s18
    %s21 = sphi 0, %s19
    %s22 = sphi 0, %s20
    %s32 = sphi 0, %s34
    %s35 = sphi 0, %s32
    %s36 = sphi 0, %s35
    %s52 = sphi 0, %s36
    %s56 = sphi 0, %s56
    %s58 = sphi 0, %s56
    %s59 = sphi 0, %s58
    %s73 = sphi 0, %s59
    %s77 = sphi 0, %s77
    %s79 = sphi 0, %s77
    %s80 = sphi 0, %s79
    %s94 = sphi 0, %s80
    %s98 = sphi 0, %s98
    %s100 = sphi 0, %s98
    %s101 = sphi 0, %s100
    %s115 = sphi 0, %s101
    %s123 = sphi 0, %s125
    %s126 = sphi 0, %s123
    %s127 = sphi 0, %s126
    %s143 = sphi 0, %s127
  $region4: #{coord_att.1} parent=0 // loop_header_branch
    %13 = sbr.rel (%p11) target = $region8
  $region5: #{coord_att.1} parent=0 // loop_body
    %s15 = ssub.s32 %s10, 1
    %s16 = ssub.s32 %s10, 2
    %s23 = sadd.s32 1, %s18
    %p24 = scmp.ge.s32.totalorder %s23, 1
    %s25 = scalar_select %p24, 0, %s23
    %s26 = sadd.s32 1, %s17
    %s27 = scalar_select %p24, %s26, %s17
    %p28 = scmp.ge.s32.totalorder %s27, 2
    %s29 = scalar_select %p28, 0, %s27
    %s30 = ssub.s32 %s18, %s25
    %p31 = scmp.eq.s32.totalorder %s30, 0
    %s33 = sadd.s32 %s32, 1
    %s34 = scalar_select %p31, %s32, %s33
    %p37 = pneg %p31
    %p38 = scmp.eq.s32.totalorder %s10, 1
    %p39 = por %p37, %p38
    %p40 = scmp.ne.s32.totalorder %s32, %s35
    %p41 = scmp.eq.s32.totalorder %s10, 0
    %p42 = por %p40, %p41
    %p43 = scmp.ne.s32.totalorder %s32, %s35
    %p44 = scmp.eq.s32.totalorder %s15, 1
    %p45 = por %p43, %p44
    %p46 = scmp.ne.s32.totalorder %s35, %s36
    %p47 = scmp.eq.s32.totalorder %s15, 0
    %p48 = por %p46, %p47
    %p49 = scmp.ne.s32.totalorder %s35, %s36
    %p50 = scmp.eq.s32.totalorder %s16, 1
    %p51 = por %p49, %p50
    %p53 = scmp.ne.s32.totalorder %s36, %s52
    %p54 = scmp.eq.s32.totalorder %s16, 0
    %p55 = por %p53, %p54
    %s57 = sadd.s32 %s56, 1
    %p60 = scmp.eq.s32.totalorder %s10, 1
    %p61 = scmp.ne.s32.totalorder %s56, %s58
    %p62 = scmp.eq.s32.totalorder %s10, 0
    %p63 = por %p61, %p62
    %p64 = scmp.ne.s32.totalorder %s56, %s58
    %p65 = scmp.eq.s32.totalorder %s15, 1
    %p66 = por %p64, %p65
    %p67 = scmp.ne.s32.totalorder %s58, %s59
    %p68 = scmp.eq.s32.totalorder %s15, 0
    %p69 = por %p67, %p68
    %p70 = scmp.ne.s32.totalorder %s58, %s59
    %p71 = scmp.eq.s32.totalorder %s16, 1
    %p72 = por %p70, %p71
    %p74 = scmp.ne.s32.totalorder %s59, %s73
    %p75 = scmp.eq.s32.totalorder %s16, 0
    %p76 = por %p74, %p75
    %s78 = sadd.s32 %s77, 1
    %p81 = scmp.eq.s32.totalorder %s10, 1
    %p82 = scmp.ne.s32.totalorder %s77, %s79
    %p83 = scmp.eq.s32.totalorder %s10, 0
    %p84 = por %p82, %p83
    %p85 = scmp.ne.s32.totalorder %s77, %s79
    %p86 = scmp.eq.s32.totalorder %s15, 1
    %p87 = por %p85, %p86
    %p88 = scmp.ne.s32.totalorder %s79, %s80
    %p89 = scmp.eq.s32.totalorder %s15, 0
    %p90 = por %p88, %p89
    %p91 = scmp.ne.s32.totalorder %s79, %s80
    %p92 = scmp.eq.s32.totalorder %s16, 1
    %p93 = por %p91, %p92
    %p95 = scmp.ne.s32.totalorder %s80, %s94
    %p96 = scmp.eq.s32.totalorder %s16, 0
    %p97 = por %p95, %p96
    %s99 = sadd.s32 %s98, 1
    %p102 = scmp.eq.s32.totalorder %s10, 1
    %p103 = scmp.ne.s32.totalorder %s98, %s100
    %p104 = scmp.eq.s32.totalorder %s10, 0
    %p105 = por %p103, %p104
    %p106 = scmp.ne.s32.totalorder %s98, %s100
    %p107 = scmp.eq.s32.totalorder %s15, 1
    %p108 = por %p106, %p107
    %p109 = scmp.ne.s32.totalorder %s100, %s101
    %p110 = scmp.eq.s32.totalorder %s15, 0
    %p111 = por %p109, %p110
    %p112 = scmp.ne.s32.totalorder %s100, %s101
    %p113 = scmp.eq.s32.totalorder %s16, 1
    %p114 = por %p112, %p113
    %p116 = scmp.ne.s32.totalorder %s101, %s115
    %p117 = scmp.eq.s32.totalorder %s16, 0
    %p118 = por %p116, %p117
    %s119 = smul.u32 %s18, %s17
    %s120 = smul.u32 %s25, %s29
    %s121 = ssub.s32 %s119, %s120
    %p122 = scmp.eq.s32.totalorder %s121, 0
    %s124 = sadd.s32 %s123, 1
    %s125 = scalar_select %p122, %s123, %s124
    %p128 = pneg %p122
    %p129 = scmp.eq.s32.totalorder %s10, 1
    %p130 = por %p128, %p129
    %p131 = scmp.ne.s32.totalorder %s123, %s126
    %p132 = scmp.eq.s32.totalorder %s10, 0
    %p133 = por %p131, %p132
    %p134 = scmp.ne.s32.totalorder %s123, %s126
    %p135 = scmp.eq.s32.totalorder %s15, 1
    %p136 = por %p134, %p135
    %p137 = scmp.ne.s32.totalorder %s126, %s127
    %p138 = scmp.eq.s32.totalorder %s15, 0
    %p139 = por %p137, %p138
    %p140 = scmp.ne.s32.totalorder %s126, %s127
    %p141 = scmp.eq.s32.totalorder %s16, 1
    %p142 = por %p140, %p141
    %p144 = scmp.ne.s32.totalorder %s127, %s143
    %p145 = scmp.eq.s32.totalorder %s16, 0
    %p146 = por %p144, %p145
    %p147 = scmp.le.s32.totalorder 1, %s10
    %p148 = scmp.lt.s32.totalorder %s10, 3
    %p149 = pnand %p147, %p148
    %p150 = pneg %p149
    // Predicated region
    $region9: #{coord_att.1} parent=5 // pred_check
      _
    $region10: #{coord_att.1} parent=5 // pred_check_branch
      %152 = sbr.rel (%p149) target = $region12
    $region11: #{coord_att.1} parent=5 // pred_region
      %s153 = ssub.s32 %s10, 1
      // Predicated region
      $region13: #{coord_att.1} parent=11 // pred_check
        %p154 = pneg %p48
      $region14: #{coord_att.1} parent=11 // pred_check_branch
        %156 = sbr.rel (%p154) target = $region16
      $region15: #{coord_att.1} parent=11 // pred_region
        %p157 = scmp.lt.s32.totalorder %s20, 0
        %s158 = scalar_select %p157, %s20, 0
        %s159 = smul.addr %s158, 8
        %s160 = scalar_lea.vmem %s0, %s159
      $region16: #{coord_att.1} parent=11 // pred_fallthru
        _
      // Predicated region
      $region17: #{coord_att.1} parent=11 // pred_check
        %p161 = pneg %p69
      $region18: #{coord_att.1} parent=11 // pred_check_branch
        %163 = sbr.rel (%p161) target = $region20
      $region19: #{coord_att.1} parent=11 // pred_region
        _
      $region20: #{coord_att.1} parent=11 // pred_fallthru
        _
      // Predicated region
      $region21: #{coord_att.1} parent=11 // pred_check
        %p164 = pneg %p90
      $region22: #{coord_att.1} parent=11 // pred_check_branch
        %166 = sbr.rel (%p164) target = $region24
      $region23: #{coord_att.1} parent=11 // pred_region
        _
      $region24: #{coord_att.1} parent=11 // pred_fallthru
        _
      // Predicated region
      $region25: #{coord_att.1} parent=11 // pred_check
        %p167 = pneg %p111
      $region26: #{coord_att.1} parent=11 // pred_check_branch
        %169 = sbr.rel (%p167) target = $region28
      $region27: #{coord_att.1} parent=11 // pred_region
        _
      $region28: #{coord_att.1} parent=11 // pred_fallthru
        _
    $region12: #{coord_att.1} parent=5 // pred_fallthru
      _
    %p170 = scmp.lt.s32.totalorder %s10, 2
    // Predicated region
    $region29: #{coord_att.1} parent=5 // pred_check
      %p171 = pneg %p170
    $region30: #{coord_att.1} parent=5 // pred_check_branch
      %173 = sbr.rel (%p171) target = $region32
    $region31: #{coord_att.1} parent=5 // pred_region
      _
    $region32: #{coord_att.1} parent=5 // pred_fallthru
      _
    %p174 = scmp.le.s32.totalorder 1, %s10
    %p175 = scmp.lt.s32.totalorder %s10, 3
    %p176 = pnand %p174, %p175
    %p177 = pneg %p176
    // Predicated region
    $region33: #{coord_att.1} parent=5 // pred_check
      _
    $region34: #{coord_att.1} parent=5 // pred_check_branch
      %179 = sbr.rel (%p176) target = $region36
    $region35: #{coord_att.1} parent=5 // pred_region
      %s180 = ssub.s32 %s10, 1
      %p181 = scmp.lt.s32.totalorder %s20, 0
      %s182 = scalar_select %p181, %s20, 0
      %s183 = smul.addr %s182, 8
      %s184 = scalar_lea.vmem %s0, %s183
      %p185 = pneg %p48
      %p186 = pneg %p45
      %p187 = pneg %p69
      %p188 = pneg %p66
      %p189 = pneg %p90
      %p190 = pneg %p87
      %p191 = pneg %p111
      %p192 = pneg %p108
      %p193 = pneg %p139
      %p194 = pneg %p136
      %s195 = smul.u32 %s20, %s19
      %p196 = scmp.lt.s32.totalorder %s195, 0
      %s197 = scalar_select %p196, %s195, 0
      %s198 = smul.addr %s197, 8
      %s199 = scalar_lea.vmem %s4, %s198
      %p200 = scmp.lt.s32.totalorder %s20, 0
      %s201 = scalar_select %p200, %s20, 0
      %s202 = smul.addr %s201, 8
      %s203 = scalar_lea.vmem %s0, %s202
      %s204 = smul.u32 %s20, %s19
      %p205 = scmp.lt.s32.totalorder %s204, 0
      %s206 = scalar_select %p205, %s204, 0
      %s207 = smul.addr %s206, 8
      %s208 = scalar_lea.vmem %s4, %s207
      %s209 = smul.u32 %s20, %s19
      %v210 = vld [vmem:[%s2] sm:$0x3f]
      %v211 = vld [vmem:[%s203] sm:$0xff]
      %v212 = vld [vmem:[%s203 + $0x8] sm:$0xff]
      %v213 = vld [vmem:[%s203 + $0x10] sm:$0xff]
      %v214 = vld [vmem:[%s203 + $0x18] sm:$0xff]
      %216 = vset.pattern.permute.xlu0 38
      %217 = vperm.xlu0 %216, %v210
      %v218 = vpop.permute.xlu0 %217
      %vm220 = vcmask 261120
      %v221 = vsel %vm220, %v210, 0
      %223 = vmatpush.msra.mxu0 0.0
      %224 = vmatpush.msra.mxu0 0.0
      %225 = vmatpush.msra.mxu0 0.0
      %226 = vmatpush.msra.mxu0 0.0
      %227 = vmatpush.msra.mxu0 0.0
      %228 = vmatpush.msra.mxu0 0.0
      %229 = vmatpush.msra.mxu0 0.0
      %230 = vmatpush.msra.mxu0 0.0
      %231 = vmatpush.msra.mxu0 0.0
      %232 = vmatpush.msra.mxu0 0.0
      %233 = vmatpush.msra.mxu0 0.0
      %234 = vmatpush.msra.mxu0 0.0
      %235 = vmatpush.msra.mxu0 %v214
      %236 = vmatpush.msra.mxu0 %v213
      %237 = vmatpush.msra.mxu0 %v212
      %238 = vmatpush.msra.mxu0 %v211
      %239 = vmatmul.f32.gmra.mxu0 %v221
      %v240 = vpop.f32.mrf.mxu0
      %v241 = vadd.f32 %v218, %v240
      %242 = vdwg.mxu0
      %p243 = scmp.eq.s32.totalorder %s19, 0
      // Predicated region
      $region37: #{coord_att.1} parent=35 // pred_check
        %p244 = pneg %p243
      $region38: #{coord_att.1} parent=35 // pred_check_branch
        %246 = sbr.rel (%p244) target = $region40
      $region39: #{coord_att.1} parent=35 // pred_region
        %p247 = scmp.eq.s32.totalorder %s20, 0
        // Predicated region
        $region41: #{coord_att.1} parent=39 // pred_check
          %p248 = pneg %p247
        $region42: #{coord_att.1} parent=39 // pred_check_branch
          %250 = sbr.rel (%p248) target = $region44
        $region43: #{coord_att.1} parent=39 // pred_region
          %vm251 = vcmask 1045504
          %v252 = vsel %vm251, %v241, 0.0
          %253 = vadd.xlane.f32.xlu0 %v252
          %v254 = vpop.xlane.xlu0 %253
          %v255 = vrcp.pop 128.0
          %v256 = vmul.f32 128.0, %v255
          %v257 = vsub.f32 1.0, %v256
          %v258 = vmul.f32 %v255, %v257
          %v259 = vadd.f32 %v255, %v258
          %vm260 = vweird.f32 %v255
          %v261 = vsel %vm260, %v255, %v259
          %v262 = vmul.f32 %v254, %v261
          %vm263 = vcmask 5120
          %264 = vst.msk [vmem:[#allocation4] sm:$0x3f] %vm263, %v262
          %265 = vst.msk [vmem:[#allocation2] sm:$0x3f] %vm263, 0.0
          %266 = vst.msk [vmem:[#allocation3] sm:$0x3f] %vm263, 0.0
        $region44: #{coord_att.1} parent=39 // pred_fallthru
          _
        %v267 = vld [vmem:[#allocation4] sm:$0x3f]
        %269 = vset.pattern.permute.xlu0 0
        %270 = vperm.xlu0 %269, %v267
        %v271 = vpop.permute.xlu0 %270
        %v273 = vsub.f32 %v241, %v271
        %v274 = vld [vmem:[#allocation2] sm:$0x3f]
        %vm275 = vcmask 1045504
        %v276 = vsel %vm275, %v273, 0.0
        %277 = vadd.xlane.f32.xlu0 %v276
        %v278 = vpop.xlane.xlu0 %277
        %v279 = vadd.f32 %v274, %v278
        %vm280 = vcmask 5120
        %281 = vst.msk [vmem:[#allocation2] sm:$0x3f] %vm280, %v279
        %v282 = vld [vmem:[#allocation3] sm:$0x3f]
        %v283 = vmul.f32 %v273, %v273
        %v284 = vsel %vm275, %v283, 0.0
        %285 = vadd.xlane.f32.xlu0 %v284
        %v286 = vpop.xlane.xlu0 %285
        %v287 = vadd.f32 %v282, %v286
        %288 = vst.msk [vmem:[#allocation3] sm:$0x3f] %vm280, %v287
        // Predicated region
        $region45: #{coord_att.1} parent=39 // pred_check
          %p289 = pneg %p247
        $region46: #{coord_att.1} parent=39 // pred_check_branch
          %291 = sbr.rel (%p289) target = $region48
        $region47: #{coord_att.1} parent=39 // pred_region
          %v292 = vld [vmem:[%s1] sm:$0xff]
          %v293 = vld [vmem:[%s1 + $0x8] sm:$0xff]
          %v294 = vld [vmem:[%s1 + $0x10] sm:$0xff]
          %v295 = vld [vmem:[%s1 + $0x18] sm:$0xff]
          %296 = vmatpush.msra.mxu0 0.0
          %297 = vmatpush.msra.mxu0 0.0
          %298 = vmatpush.msra.mxu0 0.0
          %299 = vmatpush.msra.mxu0 0.0
          %300 = vmatpush.msra.mxu0 0.0
          %301 = vmatpush.msra.mxu0 0.0
          %302 = vmatpush.msra.mxu0 0.0
          %303 = vmatpush.msra.mxu0 0.0
          %304 = vmatpush.msra.mxu0 0.0
          %305 = vmatpush.msra.mxu0 0.0
          %306 = vmatpush.msra.mxu0 0.0
          %307 = vmatpush.msra.mxu0 0.0
          %308 = vmatpush.msra.mxu0 %v295
          %309 = vmatpush.msra.mxu0 %v294
          %310 = vmatpush.msra.mxu0 %v293
          %311 = vmatpush.msra.mxu0 %v292
          %312 = vmatmul.f32.gmra.mxu0 %v221
          %v313 = vpop.f32.mrf.mxu0
          %v314 = vadd.f32 %v218, %v313
          %315 = vdwg.mxu0
          %v316 = vld [vmem:[#allocation4] sm:$0x3f]
          %318 = vset.pattern.permute.xlu0 0
          %319 = vperm.xlu0 %318, %v316
          %v320 = vpop.permute.xlu0 %319
          %v322 = vsub.f32 %v314, %v320
          %v323 = vld [vmem:[#allocation2] sm:$0x3f]
          %vm324 = vcmask 62464
          %v325 = vsel %vm324, %v322, 0.0
          %326 = vadd.xlane.f32.xlu0 %v325
          %v327 = vpop.xlane.xlu0 %326
          %v328 = vadd.f32 %v323, %v327
          %v329 = vld [vmem:[#allocation3] sm:$0x3f]
          %v330 = vmul.f32 %v322, %v322
          %v331 = vsel %vm324, %v330, 0.0
          %332 = vadd.xlane.f32.xlu0 %v331
          %v333 = vpop.xlane.xlu0 %332
          %v334 = vadd.f32 %v329, %v333
          %v335 = vmul.f32 %v328, 0.007352941
          %v336 = vmul.f32 %v334, 0.007352941
          %v337 = vmul.f32 %v335, %v335
          %v338 = vsub.f32 %v336, %v337
          %v339 = vmax.f32 %v338, 0.0
          %v340 = vadd.f32 %v339, 1e-05
          %v341 = vrsqrt.pop %v340
          %v342 = vmul.f32 %v341, %v340
          %v343 = vmul.f32 %v342, %v341
          %v344 = vmul.f32 0.5, %v343
          %v345 = vsub.f32 1.5, %v344
          %v346 = vmul.f32 %v341, %v345
          %vm347 = vweird.f32 %v340
          %vm348 = vweird.f32 %v341
          %vm349 = vmor %vm347, %vm348
          %v350 = vsel %vm349, %v341, %v346
          %352 = vrot.lane.b32.xlu0 %v350, 39
          %v353 = vpop.permute.xlu0 %352
          %v355 = vmul.f32 %v210, %v353
          %357 = vrot.lane.b32.xlu0 %v355, 89
          %v358 = vpop.permute.xlu0 %357
          %360 = vst.msk [vmem:[#allocation5] sm:$0x3f] %vm280, %v358
          %v361 = vld [vmem:[#allocation4] sm:$0x3f]
          %v362 = vadd.f32 %v361, %v335
          %v363 = vmul.f32 %v362, %v358
          %365 = vrot.lane.b32.xlu0 %v363, 40
          %v366 = vpop.permute.xlu0 %365
          %v368 = vsub.f32 %v210, %v366
          %370 = vrot.lane.b32.xlu0 %v368, 88
          %v371 = vpop.permute.xlu0 %370
          %373 = vst.msk [vmem:[#allocation6] sm:$0x3f] %vm280, %v371
        $region48: #{coord_att.1} parent=39 // pred_fallthru
          _
      $region40: #{coord_att.1} parent=35 // pred_fallthru
        _
      %p374 = scmp.eq.s32.totalorder %s19, 1
      // Predicated region
      $region49: #{coord_att.1} parent=35 // pred_check
        %p375 = pneg %p374
      $region50: #{coord_att.1} parent=35 // pred_check_branch
        %377 = sbr.rel (%p375) target = $region52
      $region51: #{coord_att.1} parent=35 // pred_region
        %v378 = vld [vmem:[#allocation5] sm:$0x3f]
        %v379 = vld [vmem:[#allocation6] sm:$0x3f]
        %381 = vset.pattern.permute.xlu0 0
        %382 = vperm.xlu0 %381, %v378
        %v383 = vpop.permute.xlu0 %382
        %v385 = vmul.f32 %v241, %v383
        %387 = vset.pattern.permute.xlu0 0
        %388 = vperm.xlu0 %387, %v379
        %v389 = vpop.permute.xlu0 %388
        %v391 = vadd.f32 %v385, %v389
        %v392 = vlaneseq
        %v393 = vand.u32 %v392, 127
        %v394 = vlaneseq
        %v395 = vshrl.u32 %v394, 7
        %v396 = vmul.u32 %v395, 16
        %vm397 = vcmp.ge.s32.totalorder %v393, %v396
        %v398 = vadd.s32 %v395, 1
        %v399 = vmul.u32 %v398, 16
        %vm400 = vcmp.lt.s32.totalorder %v393, %v399
        %vm401 = vmand %vm397, %vm400
        %v402 = vsel %vm401, 1, 0
        %v403 = vcvt.s32.f32 %v402
        %v404 = vadd.s32 %v395, 8
        %v405 = vadd.s32 %v395, 16
        %v406 = vadd.s32 %v395, 24
        %v407 = vadd.s32 %v395, 32
        %v408 = vadd.s32 %v395, 40
        %v409 = vadd.s32 %v395, 48
        %v410 = vadd.s32 %v395, 56
        %v411 = vadd.s32 %v395, 64
        %v412 = vadd.s32 %v395, 72
        %v413 = vadd.s32 %v395, 80
        %v414 = vadd.s32 %v395, 88
        %v415 = vadd.s32 %v395, 96
        %v416 = vadd.s32 %v395, 104
        %v417 = vadd.s32 %v395, 112
        %v418 = vadd.s32 %v395, 120
        %v419 = vmul.u32 %v393, 16
        %vm420 = vcmp.ge.s32.totalorder %v395, %v419
        %vm421 = vcmp.ge.s32.totalorder %v404, %v419
        %vm422 = vcmp.ge.s32.totalorder %v405, %v419
        %vm423 = vcmp.ge.s32.totalorder %v406, %v419
        %vm424 = vcmp.ge.s32.totalorder %v407, %v419
        %vm425 = vcmp.ge.s32.totalorder %v408, %v419
        %vm426 = vcmp.ge.s32.totalorder %v409, %v419
        %vm427 = vcmp.ge.s32.totalorder %v410, %v419
        %vm428 = vcmp.ge.s32.totalorder %v411, %v419
        %vm429 = vcmp.ge.s32.totalorder %v412, %v419
        %vm430 = vcmp.ge.s32.totalorder %v413, %v419
        %vm431 = vcmp.ge.s32.totalorder %v414, %v419
        %vm432 = vcmp.ge.s32.totalorder %v415, %v419
        %vm433 = vcmp.ge.s32.totalorder %v416, %v419
        %vm434 = vcmp.ge.s32.totalorder %v417, %v419
        %vm435 = vcmp.ge.s32.totalorder %v418, %v419
        %v436 = vadd.s32 %v393, 1
        %v437 = vmul.u32 %v436, 16
        %vm438 = vcmp.lt.s32.totalorder %v395, %v437
        %vm439 = vcmp.lt.s32.totalorder %v404, %v437
        %vm440 = vcmp.lt.s32.totalorder %v405, %v437
        %vm441 = vcmp.lt.s32.totalorder %v406, %v437
        %vm442 = vcmp.lt.s32.totalorder %v407, %v437
        %vm443 = vcmp.lt.s32.totalorder %v408, %v437
        %vm444 = vcmp.lt.s32.totalorder %v409, %v437
        %vm445 = vcmp.lt.s32.totalorder %v410, %v437
        %vm446 = vcmp.lt.s32.totalorder %v411, %v437
        %vm447 = vcmp.lt.s32.totalorder %v412, %v437
        %vm448 = vcmp.lt.s32.totalorder %v413, %v437
        %vm449 = vcmp.lt.s32.totalorder %v414, %v437
        %vm450 = vcmp.lt.s32.totalorder %v415, %v437
        %vm451 = vcmp.lt.s32.totalorder %v416, %v437
        %vm452 = vcmp.lt.s32.totalorder %v417, %v437
        %vm453 = vcmp.lt.s32.totalorder %v418, %v437
        %vm454 = vmand %vm420, %vm438
        %vm455 = vmand %vm421, %vm439
        %vm456 = vmand %vm422, %vm440
        %vm457 = vmand %vm423, %vm441
        %vm458 = vmand %vm424, %vm442
        %vm459 = vmand %vm425, %vm443
        %vm460 = vmand %vm426, %vm444
        %vm461 = vmand %vm427, %vm445
        %vm462 = vmand %vm428, %vm446
        %vm463 = vmand %vm429, %vm447
        %vm464 = vmand %vm430, %vm448
        %vm465 = vmand %vm431, %vm449
        %vm466 = vmand %vm432, %vm450
        %vm467 = vmand %vm433, %vm451
        %vm468 = vmand %vm434, %vm452
        %vm469 = vmand %vm435, %vm453
        %v470 = vsel %vm454, 1, 0
        %v471 = vsel %vm455, 1, 0
        %v472 = vsel %vm456, 1, 0
        %v473 = vsel %vm457, 1, 0
        %v474 = vsel %vm458, 1, 0
        %v475 = vsel %vm459, 1, 0
        %v476 = vsel %vm460, 1, 0
        %v477 = vsel %vm461, 1, 0
        %v478 = vsel %vm462, 1, 0
        %v479 = vsel %vm463, 1, 0
        %v480 = vsel %vm464, 1, 0
        %v481 = vsel %vm465, 1, 0
        %v482 = vsel %vm466, 1, 0
        %v483 = vsel %vm467, 1, 0
        %v484 = vsel %vm468, 1, 0
        %v485 = vsel %vm469, 1, 0
        %v486 = vcvt.s32.f32 %v470
        %v487 = vcvt.s32.f32 %v471
        %v488 = vcvt.s32.f32 %v472
        %v489 = vcvt.s32.f32 %v473
        %v490 = vcvt.s32.f32 %v474
        %v491 = vcvt.s32.f32 %v475
        %v492 = vcvt.s32.f32 %v476
        %v493 = vcvt.s32.f32 %v477
        %v494 = vcvt.s32.f32 %v478
        %v495 = vcvt.s32.f32 %v479
        %v496 = vcvt.s32.f32 %v480
        %v497 = vcvt.s32.f32 %v481
        %v498 = vcvt.s32.f32 %v482
        %v499 = vcvt.s32.f32 %v483
        %v500 = vcvt.s32.f32 %v484
        %v501 = vcvt.s32.f32 %v485
        %s502 = smul.u32 %s20, 8
        %v503 = vstv %s502
        %v504 = vadd.s32 %v503, %v393
        %vm505 = vcmp.eq.s32.totalorder %v395, %v504
        %v506 = vsel %vm505, 1, 0
        %v507 = vcvt.s32.f32 %v506
        %v508 = vld [vmem:[%s1] sm:$0xff]
        %v509 = vld [vmem:[%s1 + $0x8] sm:$0xff]
        %v510 = vld [vmem:[%s1 + $0x10] sm:$0xff]
        %v511 = vld [vmem:[%s1 + $0x18] sm:$0xff]
        %512 = vmatpush.msra.mxu0 0.0
        %513 = vmatpush.msra.mxu0 0.0
        %514 = vmatpush.msra.mxu0 0.0
        %515 = vmatpush.msra.mxu0 0.0
        %516 = vmatpush.msra.mxu0 0.0
        %517 = vmatpush.msra.mxu0 0.0
        %518 = vmatpush.msra.mxu0 0.0
        %519 = vmatpush.msra.mxu0 0.0
        %520 = vmatpush.msra.mxu0 0.0
        %521 = vmatpush.msra.mxu0 0.0
        %522 = vmatpush.msra.mxu0 0.0
        %523 = vmatpush.msra.mxu0 0.0
        %524 = vmatpush.msra.mxu0 %v511
        %525 = vmatpush.msra.mxu0 %v510
        %526 = vmatpush.msra.mxu0 %v509
        %527 = vmatpush.msra.mxu0 %v508
        %528 = vmatmul.f32.gmra.mxu0 %v221
        %v529 = vpop.f32.mrf.mxu0
        %v530 = vadd.f32 %v218, %v529
        %531 = vdwg.mxu0
        %v532 = vmul.f32 %v530, %v383
        %v533 = vadd.f32 %v532, %v389
        %vm534 = vcmask 64512
        %v536 = vsel %vm534, %v533, 0
        %538 = vmatpush.msra.mxu0 0.0
        %539 = vmatpush.msra.mxu0 0.0
        %540 = vmatpush.msra.mxu0 0.0
        %541 = vmatpush.msra.mxu0 0.0
        %542 = vmatpush.msra.mxu0 0.0
        %543 = vmatpush.msra.mxu0 0.0
        %544 = vmatpush.msra.mxu0 0.0
        %545 = vmatpush.msra.mxu0 0.0
        %546 = vmatpush.msra.mxu0 0.0
        %547 = vmatpush.msra.mxu0 0.0
        %548 = vmatpush.msra.mxu0 0.0
        %549 = vmatpush.msra.mxu0 0.0
        %550 = vmatpush.msra.mxu0 0.0
        %551 = vmatpush.msra.mxu0 0.0
        %552 = vmatpush.msra.mxu0 0.0
        %553 = vmatpush.msra.mxu0 %v507
        %554 = vmatmul.f32.gmra.mxu0 %v536
        %v555 = vpop.f32.mrf.mxu0
        %v556 = vadd.f32 0.0, %v555
        %557 = vdwg.mxu0
        %558 = vmatpush.msra.mxu0 %v501
        %559 = vmatpush.msra.mxu0 %v500
        %560 = vmatpush.msra.mxu0 %v499
        %561 = vmatpush.msra.mxu0 %v498
        %562 = vmatpush.msra.mxu0 %v497
        %563 = vmatpush.msra.mxu0 %v496
        %564 = vmatpush.msra.mxu0 %v495
        %565 = vmatpush.msra.mxu0 %v494
        %566 = vmatpush.msra.mxu0 %v493
        %567 = vmatpush.msra.mxu0 %v492
        %568 = vmatpush.msra.mxu0 %v491
        %569 = vmatpush.msra.mxu0 %v490
        %570 = vmatpush.msra.mxu0 %v489
        %571 = vmatpush.msra.mxu0 %v488
        %572 = vmatpush.msra.mxu0 %v487
        %573 = vmatpush.msra.mxu0 %v486
        %574 = vmatmul.f32.gmra.mxu0 %v391
        %v575 = vpop.f32.mrf.mxu0
        %v576 = vadd.f32 %v556, %v575
        %577 = vdwg.mxu0
        %v578 = vmul.f32 %v576, 0.05882353
        %579 = vset.pattern.permute.xlu0 43
        %580 = vperm.xlu0 %579, %v210
        %v581 = vpop.permute.xlu0 %580
        %583 = vrot.lane.b32.xlu0 %v210, 96
        %v584 = vpop.permute.xlu0 %583
        %vm585 = vcmask 48128
        %v586 = vsel %vm585, %v584, 0
        %vm588 = vcmask 1045504
        %v590 = vsel %vm588, %v578, 0
        %592 = vmatpush.msra.mxu0 0.0
        %593 = vmatpush.msra.mxu0 0.0
        %594 = vmatpush.msra.mxu0 0.0
        %595 = vmatpush.msra.mxu0 0.0
        %596 = vmatpush.msra.mxu0 0.0
        %597 = vmatpush.msra.mxu0 0.0
        %598 = vmatpush.msra.mxu0 0.0
        %599 = vmatpush.msra.mxu0 0.0
        %600 = vmatpush.msra.mxu0 0.0
        %601 = vmatpush.msra.mxu0 0.0
        %602 = vmatpush.msra.mxu0 0.0
        %603 = vmatpush.msra.mxu0 0.0
        %604 = vmatpush.msra.mxu0 0.0
        %605 = vmatpush.msra.mxu0 0.0
        %606 = vmatpush.msra.mxu0 0.0
        %607 = vmatpush.msra.mxu0 %v590
        %608 = vmatmul.f32.gmra.mxu0 %v586
        %v609 = vpop.f32.mrf.mxu0
        %v610 = vadd.f32 %v581, %v609
        %611 = vdwg.mxu0
        %v612 = vxor.u32 %v610, 2147483648
        %v613 = vmul.f32 %v612, 1.442695
        %v614 = vpow.pop %v613
        %v615 = vadd.f32 %v614, 1.0
        %v616 = vrcp.pop %v615
        %v617 = vmul.f32 %v615, %v616
        %v618 = vsub.f32 1.0, %v617
        %v619 = vmul.f32 %v616, %v618
        %v620 = vadd.f32 %v616, %v619
        %vm621 = vweird.f32 %v615
        %vm622 = vweird.f32 %v616
        %vm623 = vmor %vm621, %vm622
        %v624 = vsel %vm623, %v616, %v620
        %v625 = vand.u32 2147483647, %v615
        %vm626 = vcmp.eq.f32.partialorder %v625, 8.507059e+37
        %v627 = vand.u32 %v615, 2147483648
        %v628 = vor.u32 1.1754944e-38, %v627
        %v629 = vsel %vm626, %v628, %v624
        %v630 = vmul.f32 1.0, %v629
        %v632 = vsel %vm534, %v630, 0
        %634 = vmatpush.msra.mxu0 0.0
        %635 = vmatpush.msra.mxu0 0.0
        %636 = vmatpush.msra.mxu0 0.0
        %637 = vmatpush.msra.mxu0 0.0
        %638 = vmatpush.msra.mxu0 0.0
        %639 = vmatpush.msra.mxu0 0.0
        %640 = vmatpush.msra.mxu0 0.0
        %641 = vmatpush.msra.mxu0 0.0
        %642 = vmatpush.msra.mxu0 0.0
        %643 = vmatpush.msra.mxu0 0.0
        %644 = vmatpush.msra.mxu0 0.0
        %645 = vmatpush.msra.mxu0 0.0
        %646 = vmatpush.msra.mxu0 0.0
        %647 = vmatpush.msra.mxu0 0.0
        %648 = vmatpush.msra.mxu0 0.0
        %649 = vmatpush.msra.mxu0 %v403
        %650 = vmatmul.f32.gmra.mxu0 %v632
        %v651 = vpop.f32.mrf.mxu0
        %v652 = vadd.f32 0.0, %v651
        %653 = vdwg.mxu0
        %654 = vrot.lane.b32.xlu0 %v210, 127
        %v655 = vpop.permute.xlu0 %654
        %v657 = vsub.f32 %v210, %v655
        %659 = vset.pattern.permute.xlu0 41
        %660 = vperm.xlu0 %659, %v657
        %v661 = vpop.permute.xlu0 %660
        %v663 = vmul.f32 %v661, %v391
        %v664 = vmul.f32 %v652, %v663
        %v665 = vxor.u32 %v664, 2147483648
        %v666 = vmul.f32 %v665, 1.442695
        %v667 = vpow.pop %v666
        %v668 = vadd.f32 %v667, 1.0
        %v669 = vrcp.pop %v668
        %v670 = vmul.f32 %v668, %v669
        %v671 = vsub.f32 1.0, %v670
        %v672 = vmul.f32 %v669, %v671
        %v673 = vadd.f32 %v669, %v672
        %vm674 = vweird.f32 %v668
        %vm675 = vweird.f32 %v669
        %vm676 = vmor %vm674, %vm675
        %v677 = vsel %vm676, %v669, %v673
        %v678 = vand.u32 2147483647, %v668
        %vm679 = vcmp.eq.f32.partialorder %v678, 8.507059e+37
        %v680 = vand.u32 %v668, 2147483648
        %v681 = vor.u32 1.1754944e-38, %v680
        %v682 = vsel %vm679, %v681, %v677
        %v683 = vmul.f32 1.0, %v682
        %v684 = vmul.f32 %v663, %v683
        %685 = vset.pattern.permute.xlu0 42
        %686 = vperm.xlu0 %685, %v210
        %v687 = vpop.permute.xlu0 %686
        %v689 = vmul.f32 %v687, %v391
        %v690 = vadd.f32 %v684, %v689
        %v691 = vld [vmem:[%s3] sm:$0xff]
        %v692 = vld [vmem:[%s3 + $0x8] sm:$0xff]
        %v693 = vld [vmem:[%s3 + $0x10] sm:$0xff]
        %v694 = vld [vmem:[%s3 + $0x18] sm:$0xff]
        %696 = vset.pattern.permute.xlu0 6
        %697 = vperm.xlu0 %696, %v691
        %v698 = vpop.permute.xlu0 %697
        %701 = vset.pattern.permute.xlu0 6
        %702 = vperm.xlu0 %701, %v692
        %v703 = vpop.permute.xlu0 %702
        %706 = vset.pattern.permute.xlu0 6
        %707 = vperm.xlu0 %706, %v693
        %v708 = vpop.permute.xlu0 %707
        %711 = vset.pattern.permute.xlu0 6
        %712 = vperm.xlu0 %711, %v694
        %v713 = vpop.permute.xlu0 %712
        %v715 = vsel %vm585, %v691, 0
        %v717 = vsel %vm585, %v692, 0
        %v719 = vsel %vm585, %v693, 0
        %v721 = vsel %vm585, %v694, 0
        %v724 = vsel %vm588, %v690, 0
        %726 = vmatpush.msra.mxu0 0.0
        %727 = vmatpush.msra.mxu0 0.0
        %728 = vmatpush.msra.mxu0 0.0
        %729 = vmatpush.msra.mxu0 0.0
        %730 = vmatpush.msra.mxu0 0.0
        %731 = vmatpush.msra.mxu0 0.0
        %732 = vmatpush.msra.mxu0 0.0
        %733 = vmatpush.msra.mxu0 0.0
        %734 = vmatpush.msra.mxu0 0.0
        %735 = vmatpush.msra.mxu0 0.0
        %736 = vmatpush.msra.mxu0 0.0
        %737 = vmatpush.msra.mxu0 0.0
        %738 = vmatpush.msra.mxu0 0.0
        %739 = vmatpush.msra.mxu0 0.0
        %740 = vmatpush.msra.mxu0 0.0
        %741 = vmatpush.msra.mxu0 %v724
        %742 = vmatmul.f32.gmra.mxu0 %v715
        %v743 = vpop.f32.mrf.mxu0
        %v744 = vadd.f32 %v698, %v743
        %745 = vmatmul.f32.gmra.mxu0 %v717
        %v746 = vpop.f32.mrf.mxu0
        %v747 = vadd.f32 %v703, %v746
        %748 = vmatmul.f32.gmra.mxu0 %v719
        %v749 = vpop.f32.mrf.mxu0
        %v750 = vadd.f32 %v708, %v749
        %751 = vmatmul.f32.gmra.mxu0 %v721
        %v752 = vpop.f32.mrf.mxu0
        %v753 = vadd.f32 %v713, %v752
        %754 = vdwg.mxu0
        %v755 = vxor.u32 %v744, 2147483648
        %v756 = vxor.u32 %v747, 2147483648
        %v757 = vxor.u32 %v750, 2147483648
        %v758 = vxor.u32 %v753, 2147483648
        %v759 = vmul.f32 %v755, 1.442695
        %v760 = vpow.pop %v759
        %v761 = vmul.f32 %v756, 1.442695
        %v762 = vpow.pop %v761
        %v763 = vmul.f32 %v757, 1.442695
        %v764 = vpow.pop %v763
        %v765 = vmul.f32 %v758, 1.442695
        %v766 = vpow.pop %v765
        %v767 = vadd.f32 %v760, 1.0
        %v768 = vadd.f32 %v762, 1.0
        %v769 = vadd.f32 %v764, 1.0
        %v770 = vadd.f32 %v766, 1.0
        %v771 = vrcp.pop %v767
        %v772 = vmul.f32 %v767, %v771
        %v773 = vsub.f32 1.0, %v772
        %v774 = vmul.f32 %v771, %v773
        %v775 = vadd.f32 %v771, %v774
        %vm776 = vweird.f32 %v767
        %vm777 = vweird.f32 %v771
        %vm778 = vmor %vm776, %vm777
        %v779 = vsel %vm778, %v771, %v775
        %v780 = vand.u32 2147483647, %v767
        %vm781 = vcmp.eq.f32.partialorder %v780, 8.507059e+37
        %v782 = vand.u32 %v767, 2147483648
        %v783 = vor.u32 1.1754944e-38, %v782
        %v784 = vsel %vm781, %v783, %v779
        %v785 = vmul.f32 1.0, %v784
        %v786 = vrcp.pop %v768
        %v787 = vmul.f32 %v768, %v786
        %v788 = vsub.f32 1.0, %v787
        %v789 = vmul.f32 %v786, %v788
        %v790 = vadd.f32 %v786, %v789
        %vm791 = vweird.f32 %v768
        %vm792 = vweird.f32 %v786
        %vm793 = vmor %vm791, %vm792
        %v794 = vsel %vm793, %v786, %v790
        %v795 = vand.u32 2147483647, %v768
        %vm796 = vcmp.eq.f32.partialorder %v795, 8.507059e+37
        %v797 = vand.u32 %v768, 2147483648
        %v798 = vor.u32 1.1754944e-38, %v797
        %v799 = vsel %vm796, %v798, %v794
        %v800 = vmul.f32 1.0, %v799
        %v801 = vrcp.pop %v769
        %v802 = vmul.f32 %v769, %v801
        %v803 = vsub.f32 1.0, %v802
        %v804 = vmul.f32 %v801, %v803
        %v805 = vadd.f32 %v801, %v804
        %vm806 = vweird.f32 %v769
        %vm807 = vweird.f32 %v801
        %vm808 = vmor %vm806, %vm807
        %v809 = vsel %vm808, %v801, %v805
        %v810 = vand.u32 2147483647, %v769
        %vm811 = vcmp.eq.f32.partialorder %v810, 8.507059e+37
        %v812 = vand.u32 %v769, 2147483648
        %v813 = vor.u32 1.1754944e-38, %v812
        %v814 = vsel %vm811, %v813, %v809
        %v815 = vmul.f32 1.0, %v814
        %v816 = vrcp.pop %v770
        %v817 = vmul.f32 %v770, %v816
        %v818 = vsub.f32 1.0, %v817
        %v819 = vmul.f32 %v816, %v818
        %v820 = vadd.f32 %v816, %v819
        %vm821 = vweird.f32 %v770
        %vm822 = vweird.f32 %v816
        %vm823 = vmor %vm821, %vm822
        %v824 = vsel %vm823, %v816, %v820
        %v825 = vand.u32 2147483647, %v770
        %vm826 = vcmp.eq.f32.partialorder %v825, 8.507059e+37
        %v827 = vand.u32 %v770, 2147483648
        %v828 = vor.u32 1.1754944e-38, %v827
        %v829 = vsel %vm826, %v828, %v824
        %v830 = vmul.f32 1.0, %v829
        %v831 = vmul.f32 %v211, %v785
        %v832 = vmul.f32 %v212, %v800
        %v833 = vmul.f32 %v213, %v815
        %v834 = vmul.f32 %v214, %v830
        %835 = vst [vmem:[%s208] sm:$0xff] %v831
        %836 = vst [vmem:[%s208 + $0x8] sm:$0xff] %v832
        %837 = vst [vmem:[%s208 + $0x10] sm:$0xff] %v833
        %838 = vst [vmem:[%s208 + $0x18] sm:$0xff] %v834
      $region52: #{coord_att.1} parent=35 // pred_fallthru
        _
      %s839 = smul.u32 %s20, %s19
      %p840 = scmp.lt.s32.totalorder %s839, 0
      %s841 = scalar_select %p840, %s839, 0
      %s842 = smul.addr %s841, 8
      %s843 = scalar_lea.vmem %s4, %s842
      // Predicated region
      $region53: #{coord_att.1} parent=35 // pred_check
        %p844 = pneg %p136
      $region54: #{coord_att.1} parent=35 // pred_check_branch
        %846 = sbr.rel (%p844) target = $region56
      $region55: #{coord_att.1} parent=35 // pred_region
        %s847 = smul.u32 %s20, %s19
      $region56: #{coord_att.1} parent=35 // pred_fallthru
        _
    $region36: #{coord_att.1} parent=5 // pred_fallthru
      _
    %p848 = scmp.le.s32.totalorder 2, %s10
    // Predicated region
    $region57: #{coord_att.1} parent=5 // pred_check
      %p849 = pneg %p848
    $region58: #{coord_att.1} parent=5 // pred_check_branch
      %851 = sbr.rel (%p849) target = $region60
    $region59: #{coord_att.1} parent=5 // pred_region
      %s852 = ssub.s32 %s10, 2
      // Predicated region
      $region61: #{coord_att.1} parent=59 // pred_check
        %p853 = pneg %p142
      $region62: #{coord_att.1} parent=59 // pred_check_branch
        %855 = sbr.rel (%p853) target = $region64
      $region63: #{coord_att.1} parent=59 // pred_region
        %s856 = smul.u32 %s22, %s21
        %p857 = scmp.lt.s32.totalorder %s856, 0
        %s858 = scalar_select %p857, %s856, 0
        %s859 = smul.addr %s858, 8
        %s860 = scalar_lea.vmem %s4, %s859
      $region64: #{coord_att.1} parent=59 // pred_fallthru
        _
    $region60: #{coord_att.1} parent=5 // pred_fallthru
      _
  $region6: #{coord_att.1} parent=0 // loop_footer
    %s14 = sadd.s32 1, %s10
  $region7: #{coord_att.1} parent=0 // loop_footer_branch
    %9 = sbr.rel target = $region3
  $region8: #{coord_att.1} parent=0 // loop_exit
    _

</llo_original>
